<compile_context>
chip_gen: v7x
topology: tpu7x:2x2x1
jax: 0.10.0
libtpu: 0.0.40
codegen_flags: <defaults>
</compile_context>

<pallas_src>
import functools
from typing import NamedTuple

import jax
import jax.numpy as jnp
from jax.experimental import pallas as pl
from jax.experimental.pallas import tpu as pltpu

LANES = 128      # lane width of a vreg / MXU tile
SUBLANES = 8     # f32 sublane tile
OUT_PAD = 8      # narrow padded width of the kernel output (>= d_out)


def _round_up(n, m):
    return ((n + m - 1) // m) * m


class Layout(NamedTuple):
    """Static (hashable) description of the packed params slab."""
    d_in: int
    h1: int
    h2: int
    d_out: int
    w1_off: int
    b_off: int
    w2_off: int
    w3_off: int
    rows: int


def make_layout(d_in=4, h1=25, h2=30, d_out=3):
    assert max(d_in, h1, h2, d_out) <= LANES, "kernel assumes feature dims <= 128"
    assert d_out <= OUT_PAD
    w1_off = 0
    b_off = w1_off + SUBLANES          # w1 occupies one sublane tile (d_in <= 8)
    w2_off = b_off + SUBLANES          # biases occupy one sublane tile
    w3_off = w2_off + LANES
    rows = w3_off + LANES              # 272 rows, multiple of 8
    return Layout(d_in, h1, h2, d_out, w1_off, b_off, w2_off, w3_off, rows)


def pack_params(params, layout):
    """Pack all weights/biases into one zero-padded (rows, 128) f32 slab.

    Zero padding is exact: padded activation lanes stay 0 through ReLU, so the
    padded matmuls produce the same sums as the unpadded reference.
    """
    lay = layout
    w1, b1 = params["w1"], params["b1"]   # (d_in, h1), (1, h1)
    w2, b2 = params["w2"], params["b2"]   # (h1, h2),   (1, h2)
    w3, b3 = params["w3"], params["b3"]   # (h2, d_out),(1, d_out)

    slab = jnp.zeros((lay.rows, LANES), jnp.float32)
    slab = slab.at[lay.w1_off:lay.w1_off + lay.d_in, :lay.h1].set(
        w1.astype(jnp.float32))
    slab = slab.at[lay.b_off + 0, :lay.h1].set(b1.reshape(-1).astype(jnp.float32))
    slab = slab.at[lay.b_off + 1, :lay.h2].set(b2.reshape(-1).astype(jnp.float32))
    slab = slab.at[lay.b_off + 2, :lay.d_out].set(b3.reshape(-1).astype(jnp.float32))
    slab = slab.at[lay.w2_off:lay.w2_off + lay.h1, :lay.h2].set(
        w2.astype(jnp.float32))
    slab = slab.at[lay.w3_off:lay.w3_off + lay.h2, :lay.d_out].set(
        w3.astype(jnp.float32))
    return slab


def _mlp_kernel(x_ref, p_ref, o_ref, *, layout):
    lay = layout
    x = x_ref[...]                                          # (tm, d_in)

    # Static, sublane-aligned views into the single packed params slab.
    w1 = p_ref[lay.w1_off:lay.w1_off + SUBLANES, :]          # (8, 128)
    biases = p_ref[lay.b_off:lay.b_off + SUBLANES, :]        # (8, 128)
    b1 = biases[0:1, :]
    b2 = biases[1:2, :]
    b3 = biases[2:3, :]
    w2 = p_ref[lay.w2_off:lay.w2_off + LANES, :]             # (128, 128)
    w3 = p_ref[lay.w3_off:lay.w3_off + LANES, :]             # (128, 128)

    # fc1 + ReLU (small K = d_in; MXU pads internally, padding rows are zero)
    h1 = jnp.maximum(
        jnp.dot(x, w1[:lay.d_in, :], preferred_element_type=jnp.float32) + b1,
        0.0)
    # fc2 + ReLU (padded lanes of h1 are exactly 0, so full-K dot is exact)
    h2 = jnp.maximum(
        jnp.dot(h1, w2, preferred_element_type=jnp.float32) + b2, 0.0)
    # out (no activation); store only the narrow OUT_PAD lanes (cols >= d_out
    # are exactly 0 thanks to zero-padded w3/b3).
    y = jnp.dot(h2, w3, preferred_element_type=jnp.float32) + b3
    o_ref[...] = y[:, :OUT_PAD].astype(o_ref.dtype)


@functools.partial(jax.jit, static_argnames=("layout", "tm_max"))
def net_forward(x, slab, layout, tm_max=4096):
    """Forward pass of Net. x: (B, d_in) float32. Returns (B, d_out) float32."""
    lay = layout
    B, d_in = x.shape
    assert d_in == lay.d_in

    # Batch tile: big enough to amortize per-step overhead, but capped at
    # ~half the batch (rounded up to the sublane tile) so the "parallel" grid
    # axis has >= 2 steps to shard across TensorCores on v7x.
    tm = min(int(tm_max), _round_up(pl.cdiv(B, 2), SUBLANES))
    tm = max(SUBLANES, tm)
    grid = (pl.cdiv(B, tm),)

    flops = 2 * B * (lay.d_in * lay.h1 + lay.h1 * lay.h2 + lay.h2 * lay.d_out)
    bytes_accessed = (B * lay.d_in * 4          # input read
                      + B * OUT_PAD * 4         # narrow output write
                      + lay.rows * LANES * 4)   # params slab (fetched once)

    kernel = functools.partial(_mlp_kernel, layout=lay)

    y = pl.pallas_call(
        kernel,
        out_shape=jax.ShapeDtypeStruct((B, OUT_PAD), jnp.float32),
        grid=grid,
        in_specs=[
            # batch-tiled activations; last dim equals full array dim (legal)
            pl.BlockSpec((tm, lay.d_in), lambda i: (i, 0)),
            # packed params: constant block index -> fetched once, VMEM-resident
            pl.BlockSpec((lay.rows, LANES), lambda i: (0, 0)),
        ],
        # narrow output block: last dim equals the full array dim (legal)
        out_specs=pl.BlockSpec((tm, OUT_PAD), lambda i: (i, 0)),
        compiler_params=pltpu.CompilerParams(
            dimension_semantics=("parallel",)),   # megacore sharding on v7x
        cost_estimate=pl.CostEstimate(
            flops=flops, transcendentals=0, bytes_accessed=bytes_accessed),
    )(x.astype(jnp.float32), slab)

    return y[:, :lay.d_out]


def init_params(key, input_features=4, hidden1=25, hidden2=30, output_features=3):
    """Deterministic init mimicking nn.Linear's U(-1/sqrt(fan_in), 1/sqrt(fan_in)).

    Weights are stored as (in_features, out_features) — the transpose of
    PyTorch's (out, in) convention — so the kernel can do x @ W directly.
    """
    keys = jax.random.split(key, 6)

    def linear(kw, kb, fan_in, fan_out):
        bound = 1.0 / jnp.sqrt(float(fan_in))
        w = jax.random.uniform(kw, (fan_in, fan_out), jnp.float32, -bound, bound)
        b = jax.random.uniform(kb, (1, fan_out), jnp.float32, -bound, bound)
        return w, b

    w1, b1 = linear(keys[0], keys[1], input_features, hidden1)
    w2, b2 = linear(keys[2], keys[3], hidden1, hidden2)
    w3, b3 = linear(keys[4], keys[5], hidden2, output_features)
    return {"w1": w1, "b1": b1, "w2": w2, "b2": b2, "w3": w3, "b3": b3}


def net_forward_ref(x, p):
    """Plain-JAX reference for correctness checking."""
    h1 = jnp.maximum(x @ p["w1"] + p["b1"], 0.0)
    h2 = jnp.maximum(h1 @ p["w2"] + p["b2"], 0.0)
    return h2 @ p["w3"] + p["b3"]


if __name__ == "__main__":
    key = jax.random.PRNGKey(0)
    k_x, k_p = jax.random.split(key)

    layout = make_layout(input_features := 4, 25, 30, 3)
    params = init_params(k_p, input_features=input_features)
    # Pack once; the slab is reused across every forward call.
    slab = jax.block_until_ready(pack_params(params, layout))

    # Small-batch path (single grid step).
    batch = 8
    x = jax.random.normal(k_x, (batch, input_features), dtype=jnp.float32)
    y = jax.block_until_ready(net_forward(x, slab, layout))
    y_ref = net_forward_ref(x, params)
    assert y.shape == (batch, 3)
    assert jnp.allclose(y, y_ref, atol=1e-5, rtol=1e-5), \
        "mismatch vs reference (small batch)"

    # Larger, tile-non-divisible batch exercises batch tiling, the >=2-step
    # parallel grid, and the ragged last block.
    big_b = 1000
    xb = jax.random.normal(jax.random.PRNGKey(1), (big_b, input_features),
                           dtype=jnp.float32)
    yb = jax.block_until_ready(net_forward(xb, slab, layout))
    yb_ref = net_forward_ref(xb, params)
    assert yb.shape == (big_b, 3)
    assert jnp.allclose(yb, yb_ref, atol=1e-4, rtol=1e-4), \
        "mismatch vs reference (big batch)"

    print("KERNEL_OK")
</pallas_src>

<mosaic_0001>
module attributes {stable_mosaic.version = 11 : i64} {
  func.func @_mlp_kernel(%arg0: i32, %arg1: memref<8x4xf32, #tpu.memory_space<vmem>>, %arg2: memref<272x128xf32, #tpu.memory_space<vmem>>, %arg3: memref<8x8xf32, #tpu.memory_space<vmem>>) attributes {dimension_semantics = [#tpu.dimension_semantics<parallel>], iteration_bounds = array<i64: 1>, scalar_prefetch = 0 : i64, scratch_operands = 0 : i64, tpu.core_type = #tpu.core_type<tc>, window_params = [{transform_indices = @transform_0, window_bounds = array<i64: 8, 4>}, {pipeline_mode = #tpu.pipeline_mode<synchronous>, transform_indices = @transform_1, window_bounds = array<i64: 272, 128>}, {transform_indices = @transform_2, window_bounds = array<i64: 8, 8>}]} {
    %c0 = arith.constant 0 : index
    %c0_0 = arith.constant 0 : index
    %0 = vector.load %arg1[%c0, %c0_0] : memref<8x4xf32, #tpu.memory_space<vmem>>, vector<8x4xf32>
    %c0_1 = arith.constant 0 : index
    %c0_2 = arith.constant 0 : index
    %1 = vector.load %arg2[%c0_1, %c0_2] : memref<272x128xf32, #tpu.memory_space<vmem>>, vector<8x128xf32>
    %c8 = arith.constant 8 : index
    %c0_3 = arith.constant 0 : index
    %2 = vector.load %arg2[%c8, %c0_3] : memref<272x128xf32, #tpu.memory_space<vmem>>, vector<8x128xf32>
    %3 = vector.extract_strided_slice %2 {offsets = [0, 0], sizes = [1, 128], strides = [1, 1]} : vector<8x128xf32> to vector<1x128xf32>
    %4 = vector.extract_strided_slice %2 {offsets = [1, 0], sizes = [1, 128], strides = [1, 1]} : vector<8x128xf32> to vector<1x128xf32>
    %5 = vector.extract_strided_slice %2 {offsets = [2, 0], sizes = [1, 128], strides = [1, 1]} : vector<8x128xf32> to vector<1x128xf32>
    %c16 = arith.constant 16 : index
    %c0_4 = arith.constant 0 : index
    %6 = vector.load %arg2[%c16, %c0_4] : memref<272x128xf32, #tpu.memory_space<vmem>>, vector<128x128xf32>
    %c144 = arith.constant 144 : index
    %c0_5 = arith.constant 0 : index
    %7 = vector.load %arg2[%c144, %c0_5] : memref<272x128xf32, #tpu.memory_space<vmem>>, vector<128x128xf32>
    %8 = vector.extract_strided_slice %1 {offsets = [0, 0], sizes = [4, 128], strides = [1, 1]} : vector<8x128xf32> to vector<4x128xf32>
    %cst = arith.constant dense<0.000000e+00> : vector<8x128xf32>
    %9 = tpu.matmul %0, %8, %cst {dimension_numbers = #tpu.dot_dimension_numbers<[1], [0], [0], [1], [0, 0, 1, 1], [], []>} : vector<8x4xf32>, vector<4x128xf32>, vector<8x128xf32> -> vector<8x128xf32>
    %10 = vector.broadcast %3 : vector<1x128xf32> to vector<8x128xf32>
    %11 = arith.addf %9, %10 : vector<8x128xf32>
    %cst_6 = arith.constant 0.000000e+00 : f32
    %12 = vector.broadcast %cst_6 : f32 to vector<8x128xf32>
    %13 = arith.maximumf %11, %12 : vector<8x128xf32>
    %cst_7 = arith.constant dense<0.000000e+00> : vector<8x128xf32>
    %14 = tpu.matmul %13, %6, %cst_7 {dimension_numbers = #tpu.dot_dimension_numbers<[1], [0], [0], [1], [0, 0, 1, 1], [], []>} : vector<8x128xf32>, vector<128x128xf32>, vector<8x128xf32> -> vector<8x128xf32>
    %15 = vector.broadcast %4 : vector<1x128xf32> to vector<8x128xf32>
    %16 = arith.addf %14, %15 : vector<8x128xf32>
    %cst_8 = arith.constant 0.000000e+00 : f32
    %17 = vector.broadcast %cst_8 : f32 to vector<8x128xf32>
    %18 = arith.maximumf %16, %17 : vector<8x128xf32>
    %cst_9 = arith.constant dense<0.000000e+00> : vector<8x128xf32>
    %19 = tpu.matmul %18, %7, %cst_9 {dimension_numbers = #tpu.dot_dimension_numbers<[1], [0], [0], [1], [0, 0, 1, 1], [], []>} : vector<8x128xf32>, vector<128x128xf32>, vector<8x128xf32> -> vector<8x128xf32>
    %20 = vector.broadcast %5 : vector<1x128xf32> to vector<8x128xf32>
    %21 = arith.addf %19, %20 : vector<8x128xf32>
    %22 = vector.extract_strided_slice %21 {offsets = [0, 0], sizes = [8, 8], strides = [1, 1]} : vector<8x128xf32> to vector<8x8xf32>
    %c0_10 = arith.constant 0 : index
    %c0_11 = arith.constant 0 : index
    %23 = vector.load %arg3[%c0_10, %c0_11] : memref<8x8xf32, #tpu.memory_space<vmem>>, vector<8x8xf32>
    tpu.vector_store %arg3[%c0_10, %c0_11], %22 {strides = array<i32>} : memref<8x8xf32, #tpu.memory_space<vmem>>, vector<8x8xf32>,
    return
  }
  func.func @transform_0(%arg0: i32) -> (i32, i32) {
    %c0_i32 = arith.constant 0 : i32
    %c0_i32_0 = arith.constant 0 : i32
    return %arg0, %c0_i32 : i32, i32
  }
  func.func @transform_1(%arg0: i32) -> (i32, i32) {
    %c0_i32 = arith.constant 0 : i32
    %c0_i32_0 = arith.constant 0 : i32
    %c0_i32_1 = arith.constant 0 : i32
    return %c0_i32, %c0_i32_0 : i32, i32
  }
  func.func @transform_2(%arg0: i32) -> (i32, i32) {
    %c0_i32 = arith.constant 0 : i32
    %c0_i32_0 = arith.constant 0 : i32
    return %arg0, %c0_i32 : i32, i32
  }
}

</mosaic_0001>

<llo_original>
// kernel: net_forward.1
$region0: #{net_forward.1}
  #allocation0 [shape = 'u32[]', space=smem, size = 0x4, offset = 0x4, fixed_abs, tag = 'smem constant byte address 0x4 - core index']
  #allocation1 [shape = 'u32[144,128]{1,0:T(1,128)}', space=vmem, size = 0x12000, scoped, tag = 'internal scratch']
  %s0 = inlined_call_operand.vmem [shape: f32[8,4], index: 0, kind: input, shape index: {}]
  %s1 = inlined_call_operand.hbm [shape: f32[272,128], index: 1, kind: input, shape index: {}]
  %s2 = inlined_call_operand.vmem [shape: f32[8,8], index: 2, kind: output, shape index: {}]
  %s3 = sld [smem:[#allocation0]]
  $region22: #{net_forward.1} parent=0
    _
  %s5 = ssub.s32 1, %s3
  %s6 = scalar_select 0, %s5, %s3
  $region1: #{net_forward.1} parent=0
    #allocation2 [shape = 'u8[139264]{0}', space=vmem, size = 0x22000, scoped, tag = 'input window, operand 1, single buffered']
    #allocation3 [shape = 's32[1]{0}', space=sflag, size = 0x4, scoped, tag = 'scoped memory for net_forward.1']
    %7 = vsyncpa [#allocation3], 0
    // Predicated region
    $region2: #{net_forward.1} parent=1 // pred_check
      _
    $region3: #{net_forward.1} parent=1 // pred_check_branch
      %9 = sbr.rel (0) target = $region5
    $region4: #{net_forward.1} parent=1 // pred_region
      _
    $region5: #{net_forward.1} parent=1 // pred_fallthru
      _
    // Predicated region
    $region6: #{net_forward.1} parent=1 // pred_check
      _
    $region7: #{net_forward.1} parent=1 // pred_check_branch
      %11 = sbr.rel (0) target = $region9
    $region8: #{net_forward.1} parent=1 // pred_region
      %s13 = ssub.s32 4352, 4352
      %14 = vsyncadd [#allocation3], %s13
      %s15 = sshll.u32 [#allocation2], 4
      %s16 = int_to_ptr.vmem [resolvable:$true] %s15
      %21 = dma.hbm_to_vmem [thread:$0]  %s1, 4352, %s16, [#allocation3], 128, 128, 8
    $region9: #{net_forward.1} parent=1 // pred_fallthru
      _
    // Predicated region
    $region10: #{net_forward.1} parent=1 // pred_check
      _
    $region11: #{net_forward.1} parent=1 // pred_check_branch
      %23 = sbr.rel (0) target = $region13
    $region12: #{net_forward.1} parent=1 // pred_region
      %24 = dma.done [#allocation3], 4352
    $region13: #{net_forward.1} parent=1 // pred_fallthru
      _
    %v25 = vld [vmem:[%s0] sm:$0xff]
    %v26 = vld [vmem:[#allocation2] sm:$0xff]
    %v27 = vld [vmem:[#allocation2 + $0x8] sm:$0xff]
    %v28 = vld [vmem:[#allocation2 + $0x10] sm:$0xff]
    %v29 = vld [vmem:[#allocation2 + $0x18] sm:$0xff]
    %v30 = vld [vmem:[#allocation2 + $0x20] sm:$0xff]
    %v31 = vld [vmem:[#allocation2 + $0x28] sm:$0xff]
    %v32 = vld [vmem:[#allocation2 + $0x30] sm:$0xff]
    %v33 = vld [vmem:[#allocation2 + $0x38] sm:$0xff]
    %v34 = vld [vmem:[#allocation2 + $0x40] sm:$0xff]
    %v35 = vld [vmem:[#allocation2 + $0x48] sm:$0xff]
    %v36 = vld [vmem:[#allocation2 + $0x50] sm:$0xff]
    %v37 = vld [vmem:[#allocation2 + $0x58] sm:$0xff]
    %v38 = vld [vmem:[#allocation2 + $0x60] sm:$0xff]
    %v39 = vld [vmem:[#allocation2 + $0x68] sm:$0xff]
    %v40 = vld [vmem:[#allocation2 + $0x70] sm:$0xff]
    %v41 = vld [vmem:[#allocation2 + $0x78] sm:$0xff]
    %v42 = vld [vmem:[#allocation2 + $0x80] sm:$0xff]
    %v43 = vld [vmem:[#allocation2 + $0x88] sm:$0xff]
    %v44 = vld [vmem:[#allocation2 + $0x90] sm:$0xff]
    %v45 = vld [vmem:[#allocation2 + $0x98] sm:$0xff]
    %v46 = vld [vmem:[#allocation2 + $0xa0] sm:$0xff]
    %v47 = vld [vmem:[#allocation2 + $0xa8] sm:$0xff]
    %v48 = vld [vmem:[#allocation2 + $0xb0] sm:$0xff]
    %v49 = vld [vmem:[#allocation2 + $0xb8] sm:$0xff]
    %v50 = vld [vmem:[#allocation2 + $0xc0] sm:$0xff]
    %v51 = vld [vmem:[#allocation2 + $0xc8] sm:$0xff]
    %v52 = vld [vmem:[#allocation2 + $0xd0] sm:$0xff]
    %v53 = vld [vmem:[#allocation2 + $0xd8] sm:$0xff]
    %v54 = vld [vmem:[#allocation2 + $0xe0] sm:$0xff]
    %v55 = vld [vmem:[#allocation2 + $0xe8] sm:$0xff]
    %v56 = vld [vmem:[#allocation2 + $0xf0] sm:$0xff]
    %v57 = vld [vmem:[#allocation2 + $0xf8] sm:$0xff]
    %v58 = vld [vmem:[#allocation2 + $0x100] sm:$0xff]
    %v59 = vld [vmem:[#allocation2 + $0x108] sm:$0xff]
    %v60 = vlaneseq
    %v61 = vshrl.u32 %v60, 7
    %v62 = vsub.s32 0, %v61
    %v63 = vrot.slane %v27, %v62
    %vm64 = vcmask 31744
    %v66 = vsel %vm64, %v25, 0
    %vm68 = vcmask 1043456
    %v70 = vsel %vm68, %v26, 0
    %72 = vmatprep.subr.mxu0 0.0
    %73 = vmatpush1.msra.mxu0 %v70
    %74 = vmatprep.subr.mxu0 0.0
    %75 = vmatpush1.msra.mxu0 0.0
    %76 = vmatprep.subr.mxu0 0.0
    %77 = vmatpush1.msra.mxu0 0.0
    %78 = vmatprep.subr.mxu0 0.0
    %79 = vmatpush1.msra.mxu0 0.0
    %80 = vmatprep.subr.mxu0 0.0
    %81 = vmatpush1.msra.mxu0 0.0
    %82 = vmatprep.subr.mxu0 0.0
    %83 = vmatpush1.msra.mxu0 0.0
    %84 = vmatprep.subr.mxu0 0.0
    %85 = vmatpush1.msra.mxu0 0.0
    %86 = vmatprep.subr.mxu0 0.0
    %87 = vmatpush1.msra.mxu0 0.0
    %88 = vmatprep.subr.mxu0 0.0
    %89 = vmatpush1.msra.mxu0 0.0
    %90 = vmatprep.subr.mxu0 0.0
    %91 = vmatpush1.msra.mxu0 0.0
    %92 = vmatprep.subr.mxu0 0.0
    %93 = vmatpush1.msra.mxu0 0.0
    %94 = vmatprep.subr.mxu0 0.0
    %95 = vmatpush1.msra.mxu0 0.0
    %96 = vmatprep.subr.mxu0 0.0
    %97 = vmatpush1.msra.mxu0 0.0
    %98 = vmatprep.subr.mxu0 0.0
    %99 = vmatpush1.msra.mxu0 0.0
    %100 = vmatprep.subr.mxu0 0.0
    %101 = vmatpush1.msra.mxu0 0.0
    %102 = vmatprep.subr.mxu0 0.0
    %103 = vmatpush1.msra.mxu0 0.0
    %104 = vmatprep.subr.mxu0 0.0
    %105 = vmatpush1.msra.mxu0 0.0
    %106 = vmatprep.subr.mxu0 0.0
    %107 = vmatpush1.msra.mxu0 0.0
    %108 = vmatprep.subr.mxu0 0.0
    %109 = vmatpush1.msra.mxu0 0.0
    %110 = vmatprep.subr.mxu0 0.0
    %111 = vmatpush1.msra.mxu0 0.0
    %112 = vmatprep.subr.mxu0 0.0
    %113 = vmatpush1.msra.mxu0 0.0
    %114 = vmatprep.subr.mxu0 0.0
    %115 = vmatpush1.msra.mxu0 0.0
    %116 = vmatprep.subr.mxu0 0.0
    %117 = vmatpush1.msra.mxu0 0.0
    %118 = vmatprep.subr.mxu0 0.0
    %119 = vmatpush1.msra.mxu0 0.0
    %120 = vmatprep.subr.mxu0 0.0
    %121 = vmatpush1.msra.mxu0 0.0
    %122 = vmatprep.subr.mxu0 0.0
    %123 = vmatpush1.msra.mxu0 0.0
    %124 = vmatprep.subr.mxu0 0.0
    %125 = vmatpush1.msra.mxu0 0.0
    %126 = vmatprep.subr.mxu0 0.0
    %127 = vmatpush1.msra.mxu0 0.0
    %128 = vmatprep.subr.mxu0 0.0
    %129 = vmatpush1.msra.mxu0 0.0
    %130 = vmatprep.subr.mxu0 0.0
    %131 = vmatpush1.msra.mxu0 0.0
    %132 = vmatprep.subr.mxu0 0.0
    %133 = vmatpush1.msra.mxu0 0.0
    %134 = vmatprep.subr.mxu0 0.0
    %135 = vmatpush1.msra.mxu0 0.0
    %136 = vmatprep.mubr.f32.mxu0 0.0
    %137 = vmatmul.mubr.f32.gmra.mrb[0].mxu0 %v66
    %v138 = vpop.f32.mrb[0].mxu0
    %v139 = vadd.f32 %v63, %v138
    %v140 = vpop.f32.mrb[0].mxu0
    %141 = vdwg.mxu0
    %v142 = vmax.f32 %v139, 0.0
    %v143 = vlaneseq
    %v144 = vshrl.u32 %v143, 7
    %v145 = vsub.s32 1, %v144
    %v146 = vrot.slane %v27, %v145
    %147 = vmatprep.subr.mxu0 0.0
    %148 = vmatpush1.msra.mxu0 %v28
    %149 = vmatprep.subr.mxu0 0.0
    %150 = vmatpush1.msra.mxu0 %v29
    %151 = vmatprep.subr.mxu0 0.0
    %152 = vmatpush1.msra.mxu0 %v30
    %153 = vmatprep.subr.mxu0 0.0
    %154 = vmatpush1.msra.mxu0 %v31
    %155 = vmatprep.subr.mxu0 0.0
    %156 = vmatpush1.msra.mxu0 %v32
    %157 = vmatprep.subr.mxu0 0.0
    %158 = vmatpush1.msra.mxu0 %v33
    %159 = vmatprep.subr.mxu0 0.0
    %160 = vmatpush1.msra.mxu0 %v34
    %161 = vmatprep.subr.mxu0 0.0
    %162 = vmatpush1.msra.mxu0 %v35
    %163 = vmatprep.subr.mxu0 0.0
    %164 = vmatpush1.msra.mxu0 %v36
    %165 = vmatprep.subr.mxu0 0.0
    %166 = vmatpush1.msra.mxu0 %v37
    %167 = vmatprep.subr.mxu0 0.0
    %168 = vmatpush1.msra.mxu0 %v38
    %169 = vmatprep.subr.mxu0 0.0
    %170 = vmatpush1.msra.mxu0 %v39
    %171 = vmatprep.subr.mxu0 0.0
    %172 = vmatpush1.msra.mxu0 %v40
    %173 = vmatprep.subr.mxu0 0.0
    %174 = vmatpush1.msra.mxu0 %v41
    %175 = vmatprep.subr.mxu0 0.0
    %176 = vmatpush1.msra.mxu0 %v42
    %177 = vmatprep.subr.mxu0 0.0
    %178 = vmatpush1.msra.mxu0 %v43
    %179 = vmatprep.subr.mxu0 0.0
    %180 = vmatpush1.msra.mxu0 0.0
    %181 = vmatprep.subr.mxu0 0.0
    %182 = vmatpush1.msra.mxu0 0.0
    %183 = vmatprep.subr.mxu0 0.0
    %184 = vmatpush1.msra.mxu0 0.0
    %185 = vmatprep.subr.mxu0 0.0
    %186 = vmatpush1.msra.mxu0 0.0
    %187 = vmatprep.subr.mxu0 0.0
    %188 = vmatpush1.msra.mxu0 0.0
    %189 = vmatprep.subr.mxu0 0.0
    %190 = vmatpush1.msra.mxu0 0.0
    %191 = vmatprep.subr.mxu0 0.0
    %192 = vmatpush1.msra.mxu0 0.0
    %193 = vmatprep.subr.mxu0 0.0
    %194 = vmatpush1.msra.mxu0 0.0
    %195 = vmatprep.subr.mxu0 0.0
    %196 = vmatpush1.msra.mxu0 0.0
    %197 = vmatprep.subr.mxu0 0.0
    %198 = vmatpush1.msra.mxu0 0.0
    %199 = vmatprep.subr.mxu0 0.0
    %200 = vmatpush1.msra.mxu0 0.0
    %201 = vmatprep.subr.mxu0 0.0
    %202 = vmatpush1.msra.mxu0 0.0
    %203 = vmatprep.subr.mxu0 0.0
    %204 = vmatpush1.msra.mxu0 0.0
    %205 = vmatprep.subr.mxu0 0.0
    %206 = vmatpush1.msra.mxu0 0.0
    %207 = vmatprep.subr.mxu0 0.0
    %208 = vmatpush1.msra.mxu0 0.0
    %209 = vmatprep.subr.mxu0 0.0
    %210 = vmatpush1.msra.mxu0 0.0
    %211 = vmatprep.mubr.f32.mxu0 0.0
    %212 = vmatmul.mubr.f32.gmra.mrb[0].mxu0 %v142
    %v213 = vpop.f32.mrb[0].mxu0
    %v214 = vadd.f32 %v146, %v213
    %v215 = vpop.f32.mrb[0].mxu0
    %216 = vdwg.mxu0
    %v217 = vmax.f32 %v214, 0.0
    %v218 = vlaneseq
    %v219 = vshrl.u32 %v218, 7
    %v220 = vsub.s32 2, %v219
    %v221 = vrot.slane %v27, %v220
    %222 = vmatprep.subr.mxu0 0.0
    %223 = vmatpush1.msra.mxu0 %v44
    %224 = vmatprep.subr.mxu0 0.0
    %225 = vmatpush1.msra.mxu0 %v45
    %226 = vmatprep.subr.mxu0 0.0
    %227 = vmatpush1.msra.mxu0 %v46
    %228 = vmatprep.subr.mxu0 0.0
    %229 = vmatpush1.msra.mxu0 %v47
    %230 = vmatprep.subr.mxu0 0.0
    %231 = vmatpush1.msra.mxu0 %v48
    %232 = vmatprep.subr.mxu0 0.0
    %233 = vmatpush1.msra.mxu0 %v49
    %234 = vmatprep.subr.mxu0 0.0
    %235 = vmatpush1.msra.mxu0 %v50
    %236 = vmatprep.subr.mxu0 0.0
    %237 = vmatpush1.msra.mxu0 %v51
    %238 = vmatprep.subr.mxu0 0.0
    %239 = vmatpush1.msra.mxu0 %v52
    %240 = vmatprep.subr.mxu0 0.0
    %241 = vmatpush1.msra.mxu0 %v53
    %242 = vmatprep.subr.mxu0 0.0
    %243 = vmatpush1.msra.mxu0 %v54
    %244 = vmatprep.subr.mxu0 0.0
    %245 = vmatpush1.msra.mxu0 %v55
    %246 = vmatprep.subr.mxu0 0.0
    %247 = vmatpush1.msra.mxu0 %v56
    %248 = vmatprep.subr.mxu0 0.0
    %249 = vmatpush1.msra.mxu0 %v57
    %250 = vmatprep.subr.mxu0 0.0
    %251 = vmatpush1.msra.mxu0 %v58
    %252 = vmatprep.subr.mxu0 0.0
    %253 = vmatpush1.msra.mxu0 %v59
    %254 = vmatprep.subr.mxu0 0.0
    %255 = vmatpush1.msra.mxu0 0.0
    %256 = vmatprep.subr.mxu0 0.0
    %257 = vmatpush1.msra.mxu0 0.0
    %258 = vmatprep.subr.mxu0 0.0
    %259 = vmatpush1.msra.mxu0 0.0
    %260 = vmatprep.subr.mxu0 0.0
    %261 = vmatpush1.msra.mxu0 0.0
    %262 = vmatprep.subr.mxu0 0.0
    %263 = vmatpush1.msra.mxu0 0.0
    %264 = vmatprep.subr.mxu0 0.0
    %265 = vmatpush1.msra.mxu0 0.0
    %266 = vmatprep.subr.mxu0 0.0
    %267 = vmatpush1.msra.mxu0 0.0
    %268 = vmatprep.subr.mxu0 0.0
    %269 = vmatpush1.msra.mxu0 0.0
    %270 = vmatprep.subr.mxu0 0.0
    %271 = vmatpush1.msra.mxu0 0.0
    %272 = vmatprep.subr.mxu0 0.0
    %273 = vmatpush1.msra.mxu0 0.0
    %274 = vmatprep.subr.mxu0 0.0
    %275 = vmatpush1.msra.mxu0 0.0
    %276 = vmatprep.subr.mxu0 0.0
    %277 = vmatpush1.msra.mxu0 0.0
    %278 = vmatprep.subr.mxu0 0.0
    %279 = vmatpush1.msra.mxu0 0.0
    %280 = vmatprep.subr.mxu0 0.0
    %281 = vmatpush1.msra.mxu0 0.0
    %282 = vmatprep.subr.mxu0 0.0
    %283 = vmatpush1.msra.mxu0 0.0
    %284 = vmatprep.subr.mxu0 0.0
    %285 = vmatpush1.msra.mxu0 0.0
    %286 = vmatprep.mubr.f32.mxu0 0.0
    %287 = vmatmul.mubr.f32.gmra.mrb[0].mxu0 %v217
    %v288 = vpop.f32.mrb[0].mxu0
    %v289 = vadd.f32 %v221, %v288
    %v290 = vpop.f32.mrb[0].mxu0
    %291 = vdwg.mxu0
    %vm292 = vcmask 64512
    %293 = vst.msk [vmem:[%s2] sm:$0xff] %vm292, %v289
    // Predicated region
    $region14: #{net_forward.1} parent=1 // pred_check
      _
    $region15: #{net_forward.1} parent=1 // pred_check_branch
      %295 = sbr.rel (0) target = $region17
    $region16: #{net_forward.1} parent=1 // pred_region
      _
    $region17: #{net_forward.1} parent=1 // pred_fallthru
      _
    // Predicated region
    $region18: #{net_forward.1} parent=1 // pred_check
      _
    $region19: #{net_forward.1} parent=1 // pred_check_branch
      %297 = sbr.rel (0) target = $region21
    $region20: #{net_forward.1} parent=1 // pred_region
      _
    $region21: #{net_forward.1} parent=1 // pred_fallthru
      _
    %298 = vsyncpa [#allocation3], 1

</llo_original>
